<compile_context>
chip_gen: v5e
topology: v5e:2x2
jax: 0.10.0
libtpu: 0.0.40
codegen_flags: <defaults>
</compile_context>

<pallas_src>
import jax
import jax.numpy as jnp
from jax.experimental import pallas as pl
from jax.experimental.pallas import tpu as pltpu


def _round_up(x, m):
    return (x + m - 1) // m * m


def _linear_kernel(x_ref, w_ref, b_ref, o_ref, acc_ref):
    # x_ref: (tm, tk)  w_ref: (tn, tk)  b_ref: (1, tn)
    # o_ref: (tm, tn)  acc_ref: (tm, tn) f32 scratch
    k = pl.program_id(2)

    @pl.when(k == 0)
    def _():
        acc_ref[...] = jnp.zeros_like(acc_ref)

    # MXU matmul, contracting the K axis of both tiles (x @ w_tile.T),
    # accumulated in f32.  The transpose touches only the VMEM tile.
    acc_ref[...] += jnp.dot(
        x_ref[...], w_ref[...].T, preferred_element_type=jnp.float32
    )

    @pl.when(k == pl.num_programs(2) - 1)
    def _():
        # Bias add + cast happen exactly once, on the final K step.
        o_ref[...] = (acc_ref[...] + b_ref[...].astype(jnp.float32)).astype(
            o_ref.dtype
        )


def linear_classifier_forward(
    x, weight, bias, *, compute_dtype=jnp.bfloat16, tm=None, tn=None, tk=None
):
    """x: (B, *feat); weight: (L, D) PyTorch layout; bias: (L,). Returns (B, L)."""
    B = x.shape[0]
    x2d = x.reshape(B, -1)                      # x.view(x.size(0), -1)
    D = x2d.shape[1]
    L, Dw = weight.shape
    assert Dw == D, f"weight shape {weight.shape} incompatible with D={D}"

    out_dtype = x2d.dtype

    # ---- tile sizes (clamped to the problem; always (8,128)-aligned) ----
    if tm is None:
        tm = min(256, _round_up(B, 8))
    if tn is None:
        tn = min(256, _round_up(L, 128))
    if tk is None:
        tk = min(512, _round_up(D, 128))

    M_pad = _round_up(B, tm)
    N_pad = _round_up(L, tn)
    K_pad = _round_up(D, tk)

    # ---- pad + cast operands (zero padding is exact for matmul/bias) ----
    x_p = x2d.astype(compute_dtype)
    if (M_pad, K_pad) != (B, D):
        x_p = jnp.pad(x_p, ((0, M_pad - B), (0, K_pad - D)))

    w_p = weight.astype(compute_dtype)          # stays (L, D): no HBM transpose
    if (N_pad, K_pad) != (L, D):
        w_p = jnp.pad(w_p, ((0, N_pad - L), (0, K_pad - D)))

    b_p = bias.astype(jnp.float32).reshape(1, L)
    if N_pad != L:
        b_p = jnp.pad(b_p, ((0, 0), (0, N_pad - L)))

    grid = (M_pad // tm, N_pad // tn, K_pad // tk)

    elt = jnp.dtype(compute_dtype).itemsize
    cost = pl.CostEstimate(
        flops=2 * M_pad * K_pad * N_pad,
        transcendentals=0,
        bytes_accessed=(M_pad * K_pad + N_pad * K_pad) * elt
        + M_pad * N_pad * jnp.dtype(out_dtype).itemsize
        + N_pad * 4,
    )

    out = pl.pallas_call(
        _linear_kernel,
        out_shape=jax.ShapeDtypeStruct((M_pad, N_pad), out_dtype),
        grid_spec=pltpu.PrefetchScalarGridSpec(
            num_scalar_prefetch=0,
            grid=grid,
            in_specs=[
                pl.BlockSpec((tm, tk), lambda i, j, k: (i, k)),   # x tile
                pl.BlockSpec((tn, tk), lambda i, j, k: (j, k)),   # W tile (L,D layout)
                pl.BlockSpec((1, tn), lambda i, j, k: (0, j)),    # bias tile
            ],
            out_specs=pl.BlockSpec((tm, tn), lambda i, j, k: (i, j)),
            scratch_shapes=[pltpu.VMEM((tm, tn), jnp.float32)],
        ),
        compiler_params=pltpu.CompilerParams(
            dimension_semantics=("parallel", "parallel", "arbitrary"),
        ),
        cost_estimate=cost,
    )(x_p, w_p, b_p)

    return out[:B, :L]


if __name__ == "__main__":
    key = jax.random.PRNGKey(0)
    k_x, k_w = jax.random.split(key)

    # Small, module-consistent shapes: frozen-feature input (B, C, H, W)
    B, C, H, W = 2, 4, 16, 16
    dim = C * H * W            # 1024
    num_labels = 16

    x = jax.random.normal(k_x, (B, C, H, W), dtype=jnp.float32)

    # Deterministic parameter init mirroring the module's __init__:
    #   weight ~ Normal(0, 0.01), bias = 0
    weight = 0.01 * jax.random.normal(k_w, (num_labels, dim), dtype=jnp.float32)
    bias = jnp.zeros((num_labels,), dtype=jnp.float32)

    y = linear_classifier_forward(x, weight, bias)
    jax.block_until_ready(y)
    assert y.shape == (B, num_labels)

    # Reference matching the kernel's compute path (bf16 operands, f32 accumulate).
    x2d = x.reshape(B, -1)
    ref_bf16 = (
        x2d.astype(jnp.bfloat16).astype(jnp.float32)
        @ weight.astype(jnp.bfloat16).astype(jnp.float32).T
        + bias
    )
    assert jnp.allclose(y, ref_bf16, atol=1e-4, rtol=1e-4)

    # Loose sanity check against the pure-f32 PyTorch-equivalent math.
    ref_f32 = x2d @ weight.T + bias
    assert jnp.allclose(y, ref_f32, atol=2e-2, rtol=2e-2)

    print("KERNEL_OK")
</pallas_src>

<mosaic_0001>
module attributes {stable_mosaic.version = 11 : i64} {
  func.func @_linear_kernel(%arg0: i32, %arg1: i32, %arg2: i32, %arg3: memref<8x512xbf16, #tpu.memory_space<vmem>>, %arg4: memref<128x512xbf16, #tpu.memory_space<vmem>>, %arg5: memref<1x128xf32, #tpu.memory_space<vmem>>, %arg6: memref<8x128xf32, #tpu.memory_space<vmem>>, %arg7: memref<8x128xf32, #tpu.memory_space<vmem>>) attributes {dimension_semantics = [#tpu.dimension_semantics<parallel>, #tpu.dimension_semantics<parallel>, #tpu.dimension_semantics<arbitrary>], iteration_bounds = array<i64: 1, 1, 2>, scalar_prefetch = 0 : i64, scratch_operands = 1 : i64, tpu.core_type = #tpu.core_type<tc>, window_params = [{transform_indices = @transform_0, window_bounds = array<i64: 8, 512>}, {transform_indices = @transform_1, window_bounds = array<i64: 128, 512>}, {transform_indices = @transform_2, window_bounds = array<i64: 1, 128>}, {transform_indices = @transform_3, window_bounds = array<i64: 8, 128>}]} {
    %c0_i32 = arith.constant 0 : i32
    %0 = arith.cmpi eq, %arg2, %c0_i32 : i32
    %1 = arith.extui %0 : i1 to i32
    %c0_i32_0 = arith.constant 0 : i32
    %2 = arith.cmpi ne, %1, %c0_i32_0 : i32
    scf.if %2 {
      %cst_9 = arith.constant 0.000000e+00 : f32
      %13 = vector.broadcast %cst_9 : f32 to vector<8x128xf32>
      %c0_10 = arith.constant 0 : index
      %c0_11 = arith.constant 0 : index
      %14 = vector.load %arg7[%c0_10, %c0_11] : memref<8x128xf32, #tpu.memory_space<vmem>>, vector<8x128xf32>
      tpu.vector_store %arg7[%c0_10, %c0_11], %13 {strides = array<i32>} : memref<8x128xf32, #tpu.memory_space<vmem>>, vector<8x128xf32>,
    } else {
    }
    %c0 = arith.constant 0 : index
    %c0_1 = arith.constant 0 : index
    %3 = vector.load %arg7[%c0, %c0_1] : memref<8x128xf32, #tpu.memory_space<vmem>>, vector<8x128xf32>
    %c0_2 = arith.constant 0 : index
    %c0_3 = arith.constant 0 : index
    %4 = vector.load %arg3[%c0_2, %c0_3] : memref<8x512xbf16, #tpu.memory_space<vmem>>, vector<8x512xbf16>
    %c0_4 = arith.constant 0 : index
    %c0_5 = arith.constant 0 : index
    %5 = vector.load %arg4[%c0_4, %c0_5] : memref<128x512xbf16, #tpu.memory_space<vmem>>, vector<128x512xbf16>
    %6 = tpu.transpose %5, [1, 0] : vector<128x512xbf16> -> vector<512x128xbf16>
    %cst = arith.constant dense<0.000000e+00> : vector<8x128xf32>
    %7 = tpu.matmul %4, %6, %cst {dimension_numbers = #tpu.dot_dimension_numbers<[1], [0], [0], [1], [0, 0, 1, 1], [], []>} : vector<8x512xbf16>, vector<512x128xbf16>, vector<8x128xf32> -> vector<8x128xf32>
    %8 = arith.addf %3, %7 : vector<8x128xf32>
    %c0_6 = arith.constant 0 : index
    %c0_7 = arith.constant 0 : index
    %9 = vector.load %arg7[%c0_6, %c0_7] : memref<8x128xf32, #tpu.memory_space<vmem>>, vector<8x128xf32>
    tpu.vector_store %arg7[%c0_6, %c0_7], %8 {strides = array<i32>} : memref<8x128xf32, #tpu.memory_space<vmem>>, vector<8x128xf32>,
    %c1_i32 = arith.constant 1 : i32
    %10 = arith.cmpi eq, %arg2, %c1_i32 : i32
    %11 = arith.extui %10 : i1 to i32
    %c0_i32_8 = arith.constant 0 : i32
    %12 = arith.cmpi ne, %11, %c0_i32_8 : i32
    scf.if %12 {
      %c0_9 = arith.constant 0 : index
      %c0_10 = arith.constant 0 : index
      %13 = vector.load %arg7[%c0_9, %c0_10] : memref<8x128xf32, #tpu.memory_space<vmem>>, vector<8x128xf32>
      %c0_11 = arith.constant 0 : index
      %c0_12 = arith.constant 0 : index
      %14 = vector.load %arg5[%c0_11, %c0_12] : memref<1x128xf32, #tpu.memory_space<vmem>>, vector<1x128xf32>
      %15 = vector.broadcast %14 : vector<1x128xf32> to vector<8x128xf32>
      %16 = arith.addf %13, %15 : vector<8x128xf32>
      %c0_13 = arith.constant 0 : index
      %c0_14 = arith.constant 0 : index
      %17 = vector.load %arg6[%c0_13, %c0_14] : memref<8x128xf32, #tpu.memory_space<vmem>>, vector<8x128xf32>
      tpu.vector_store %arg6[%c0_13, %c0_14], %16 {strides = array<i32>} : memref<8x128xf32, #tpu.memory_space<vmem>>, vector<8x128xf32>,
    } else {
    }
    return
  }
  func.func @transform_0(%arg0: i32, %arg1: i32, %arg2: i32) -> (i32, i32) {
    %c0_i32 = arith.constant 0 : i32
    return %arg0, %arg2 : i32, i32
  }
  func.func @transform_1(%arg0: i32, %arg1: i32, %arg2: i32) -> (i32, i32) {
    %c0_i32 = arith.constant 0 : i32
    return %arg1, %arg2 : i32, i32
  }
  func.func @transform_2(%arg0: i32, %arg1: i32, %arg2: i32) -> (i32, i32) {
    %c0_i32 = arith.constant 0 : i32
    %c0_i32_0 = arith.constant 0 : i32
    return %c0_i32, %arg1 : i32, i32
  }
  func.func @transform_3(%arg0: i32, %arg1: i32, %arg2: i32) -> (i32, i32) {
    %c0_i32 = arith.constant 0 : i32
    return %arg0, %arg1 : i32, i32
  }
}

</mosaic_0001>

<llo_original>
// kernel: tpu_custom_call.1
$region0: #{tpu_custom_call.1}
  #allocation0 [shape = 'u32[]', space=smem, size = 0x4, offset = 0x4, fixed_abs, tag = 'smem constant byte address 0x4 - core index']
  #allocation1 [shape = 'u32[72,128]{1,0:T(1,128)}', space=vmem, size = 0x9000, scoped, tag = 'internal scratch']
  #allocation2 [shape = 'f32[8,128]{1,0:T(8,128)}', space=vmem, size = 0x1000, scoped, tag = 'scratch operand']
  %s0 = inlined_call_operand.hbm [shape: bf16[8,1024], index: 0, kind: input, shape index: {}]
  %s1 = inlined_call_operand.hbm [shape: bf16[128,1024], index: 1, kind: input, shape index: {}]
  %s2 = inlined_call_operand.vmem [shape: f32[1,128], index: 2, kind: input, shape index: {}]
  %s3 = inlined_call_operand.hbm [shape: f32[8,128], index: 3, kind: output, shape index: {}]
  %s4 = sld [smem:[#allocation0]]
  $region61: #{tpu_custom_call.1} parent=0
    _
  %s6 = ssub.s32 1, %s4
  %s7 = scalar_select 0, %s6, %s4
  $region1: #{tpu_custom_call.1} parent=0
    #allocation3 [shape = 'u8[16384]{0}', space=vmem, size = 0x4000, scoped, tag = 'input window, operand 0']
    #allocation4 [shape = 's32[2]{0}', space=sflag, size = 0x8, scoped, tag = 'scoped memory for tpu_custom_call.1']
    #allocation5 [shape = 's32[2]{0}', space=sflag, size = 0x8, scoped, tag = 'scoped memory for tpu_custom_call.1']
    #allocation6 [shape = 'u8[262144]{0}', space=vmem, size = 0x40000, scoped, tag = 'input window, operand 1']
    #allocation7 [shape = 's32[2]{0}', space=sflag, size = 0x8, scoped, tag = 'scoped memory for tpu_custom_call.1']
    #allocation8 [shape = 'u8[4096]{0}', space=vmem, size = 0x1000, scoped, tag = 'output window, operand 0, single buffered']
    %8 = vsyncpa [#allocation4], 0
    %s9 = scalar_lea.sflag [#allocation4], 1
    %10 = vsyncpa %s9, 0
    %11 = vsyncpa [#allocation7], 0
    %s12 = scalar_lea.sflag [#allocation7], 1
    %13 = vsyncpa %s12, 0
    %14 = vsyncpa [#allocation5], 0
    loop: start=0, step=1, limit=4
    $region2: #{tpu_custom_call.1} parent=1 // loop_pre_header
      _
    $region3: #{tpu_custom_call.1} parent=1 // loop_header
      %s16 = sphi 0, %s20
      %p17 = scmp.ge.s32.totalorder %s16, 4
      %s23 = sphi 0, %s42
      %s24 = sphi 0, %s38
      %s25 = sphi 0, %s34
      %s26 = sphi 0, %s23
      %s27 = sphi 0, %s24
      %s28 = sphi 0, %s25
      %s29 = sphi 0, %s26
      %s30 = sphi 0, %s27
      %s31 = sphi 0, %s28
      %s47 = sphi 0, %s49
      %s50 = sphi 0, %s47
      %s51 = sphi 0, %s50
      %s67 = sphi 0, %s51
      %s75 = sphi 0, %s77
      %s78 = sphi 0, %s75
      %s79 = sphi 0, %s78
      %s95 = sphi 0, %s79
      %s101 = sphi 0, %s103
      %s104 = sphi 0, %s101
      %s105 = sphi 0, %s104
      %s121 = sphi 0, %s105
      %s129 = sphi 0, %s131
      %s132 = sphi 0, %s129
      %s133 = sphi 0, %s132
      %s149 = sphi 0, %s133
    $region4: #{tpu_custom_call.1} parent=1 // loop_header_branch
      %19 = sbr.rel (%p17) target = $region8
    $region5: #{tpu_custom_call.1} parent=1 // loop_body
      %s21 = ssub.s32 %s16, 1
      %s22 = ssub.s32 %s16, 2
      %s32 = sadd.s32 1, %s25
      %p33 = scmp.ge.s32.totalorder %s32, 2
      %s34 = scalar_select %p33, 0, %s32
      %s35 = sadd.s32 1, %s24
      %s36 = scalar_select %p33, %s35, %s24
      %p37 = scmp.ge.s32.totalorder %s36, 1
      %s38 = scalar_select %p37, 0, %s36
      %s39 = sadd.s32 1, %s23
      %s40 = scalar_select %p37, %s39, %s23
      %p41 = scmp.ge.s32.totalorder %s40, 1
      %s42 = scalar_select %p41, 0, %s40
      %s43 = ssub.s32 %s23, %s42
      %s44 = ssub.s32 %s25, %s34
      %s45 = sor.u32 %s43, %s44
      %p46 = scmp.eq.s32.totalorder %s45, 0
      %s48 = sadd.s32 %s47, 1
      %s49 = scalar_select %p46, %s47, %s48
      %p52 = pneg %p46
      %p53 = scmp.eq.s32.totalorder %s16, 1
      %p54 = por %p52, %p53
      %p55 = scmp.ne.s32.totalorder %s47, %s50
      %p56 = scmp.eq.s32.totalorder %s16, 0
      %p57 = por %p55, %p56
      %p58 = scmp.ne.s32.totalorder %s47, %s50
      %p59 = scmp.eq.s32.totalorder %s21, 1
      %p60 = por %p58, %p59
      %p61 = scmp.ne.s32.totalorder %s50, %s51
      %p62 = scmp.eq.s32.totalorder %s21, 0
      %p63 = por %p61, %p62
      %p64 = scmp.ne.s32.totalorder %s50, %s51
      %p65 = scmp.eq.s32.totalorder %s22, 1
      %p66 = por %p64, %p65
      %p68 = scmp.ne.s32.totalorder %s51, %s67
      %p69 = scmp.eq.s32.totalorder %s22, 0
      %p70 = por %p68, %p69
      %s71 = ssub.s32 %s24, %s38
      %s72 = ssub.s32 %s25, %s34
      %s73 = sor.u32 %s71, %s72
      %p74 = scmp.eq.s32.totalorder %s73, 0
      %s76 = sadd.s32 %s75, 1
      %s77 = scalar_select %p74, %s75, %s76
      %p80 = pneg %p74
      %p81 = scmp.eq.s32.totalorder %s16, 1
      %p82 = por %p80, %p81
      %p83 = scmp.ne.s32.totalorder %s75, %s78
      %p84 = scmp.eq.s32.totalorder %s16, 0
      %p85 = por %p83, %p84
      %p86 = scmp.ne.s32.totalorder %s75, %s78
      %p87 = scmp.eq.s32.totalorder %s21, 1
      %p88 = por %p86, %p87
      %p89 = scmp.ne.s32.totalorder %s78, %s79
      %p90 = scmp.eq.s32.totalorder %s21, 0
      %p91 = por %p89, %p90
      %p92 = scmp.ne.s32.totalorder %s78, %s79
      %p93 = scmp.eq.s32.totalorder %s22, 1
      %p94 = por %p92, %p93
      %p96 = scmp.ne.s32.totalorder %s79, %s95
      %p97 = scmp.eq.s32.totalorder %s22, 0
      %p98 = por %p96, %p97
      %s99 = ssub.s32 %s24, %s38
      %p100 = scmp.eq.s32.totalorder %s99, 0
      %s102 = sadd.s32 %s101, 1
      %s103 = scalar_select %p100, %s101, %s102
      %p106 = pneg %p100
      %p107 = scmp.eq.s32.totalorder %s16, 1
      %p108 = por %p106, %p107
      %p109 = scmp.ne.s32.totalorder %s101, %s104
      %p110 = scmp.eq.s32.totalorder %s16, 0
      %p111 = por %p109, %p110
      %p112 = scmp.ne.s32.totalorder %s101, %s104
      %p113 = scmp.eq.s32.totalorder %s21, 1
      %p114 = por %p112, %p113
      %p115 = scmp.ne.s32.totalorder %s104, %s105
      %p116 = scmp.eq.s32.totalorder %s21, 0
      %p117 = por %p115, %p116
      %p118 = scmp.ne.s32.totalorder %s104, %s105
      %p119 = scmp.eq.s32.totalorder %s22, 1
      %p120 = por %p118, %p119
      %p122 = scmp.ne.s32.totalorder %s105, %s121
      %p123 = scmp.eq.s32.totalorder %s22, 0
      %p124 = por %p122, %p123
      %s125 = ssub.s32 %s23, %s42
      %s126 = ssub.s32 %s24, %s38
      %s127 = sor.u32 %s125, %s126
      %p128 = scmp.eq.s32.totalorder %s127, 0
      %s130 = sadd.s32 %s129, 1
      %s131 = scalar_select %p128, %s129, %s130
      %p134 = pneg %p128
      %p135 = scmp.eq.s32.totalorder %s16, 1
      %p136 = por %p134, %p135
      %p137 = scmp.ne.s32.totalorder %s129, %s132
      %p138 = scmp.eq.s32.totalorder %s16, 0
      %p139 = por %p137, %p138
      %p140 = scmp.ne.s32.totalorder %s129, %s132
      %p141 = scmp.eq.s32.totalorder %s21, 1
      %p142 = por %p140, %p141
      %p143 = scmp.ne.s32.totalorder %s132, %s133
      %p144 = scmp.eq.s32.totalorder %s21, 0
      %p145 = por %p143, %p144
      %p146 = scmp.ne.s32.totalorder %s132, %s133
      %p147 = scmp.eq.s32.totalorder %s22, 1
      %p148 = por %p146, %p147
      %p150 = scmp.ne.s32.totalorder %s133, %s149
      %p151 = scmp.eq.s32.totalorder %s22, 0
      %p152 = por %p150, %p151
      %p153 = scmp.le.s32.totalorder 1, %s16
      %p154 = scmp.lt.s32.totalorder %s16, 3
      %p155 = pnand %p153, %p154
      %p156 = pneg %p155
      // Predicated region
      $region9: #{tpu_custom_call.1} parent=5 // pred_check
        _
      $region10: #{tpu_custom_call.1} parent=5 // pred_check_branch
        %158 = sbr.rel (%p155) target = $region12
      $region11: #{tpu_custom_call.1} parent=5 // pred_region
        %s159 = ssub.s32 %s16, 1
        // Predicated region
        $region13: #{tpu_custom_call.1} parent=11 // pred_check
          %p160 = pneg %p117
        $region14: #{tpu_custom_call.1} parent=11 // pred_check_branch
          %162 = sbr.rel (%p160) target = $region16
        $region15: #{tpu_custom_call.1} parent=11 // pred_region
          %p163 = scmp.lt.s32.totalorder %s27, 0
          %s164 = scalar_select %p163, %s27, 0
          %s165 = scalar_lea.vmem %s2, %s164
        $region16: #{tpu_custom_call.1} parent=11 // pred_fallthru
          _
      $region12: #{tpu_custom_call.1} parent=5 // pred_fallthru
        _
      %p166 = scmp.lt.s32.totalorder %s16, 2
      // Predicated region
      $region17: #{tpu_custom_call.1} parent=5 // pred_check
        %p167 = pneg %p166
      $region18: #{tpu_custom_call.1} parent=5 // pred_check_branch
        %169 = sbr.rel (%p167) target = $region20
      $region19: #{tpu_custom_call.1} parent=5 // pred_region
        // Predicated region
        $region21: #{tpu_custom_call.1} parent=19 // pred_check
          %p170 = pneg %p57
        $region22: #{tpu_custom_call.1} parent=19 // pred_check_branch
          %172 = sbr.rel (%p170) target = $region24
        $region23: #{tpu_custom_call.1} parent=19 // pred_region
          %s173 = sand.u32 %s47, 1
          %s174 = scalar_lea.sflag [#allocation4], %s173
          %s175 = sand.u32 %s47, 1
          %s176 = smul.addr %s175, 16
          %s177 = scalar_lea.vmem [#allocation3], %s176
          %s178 = smul.u32 4, %s25
          %180 = vsyncadd %s174, 0
          %s181 = smul.addr %s23, 8
          %s182 = sadd.s32 %s178, %s181
          %s183 = smul.addr %s182, 4
          %s184 = scalar_lea.hbm %s0, %s183
          %s186 = sshll.u32 %s184, 4
          %s187 = int_to_ptr.hbm [resolvable:$true] %s186
          %s188 = sshll.u32 %s177, 4
          %s189 = int_to_ptr.vmem [resolvable:$true] %s188
          %191 = dma.hbm_to_vmem [thread:$0]  %s187, 256, %s189, %s174
        $region24: #{tpu_custom_call.1} parent=19 // pred_fallthru
          _
        // Predicated region
        $region25: #{tpu_custom_call.1} parent=19 // pred_check
          %p192 = pneg %p85
        $region26: #{tpu_custom_call.1} parent=19 // pred_check_branch
          %194 = sbr.rel (%p192) target = $region28
        $region27: #{tpu_custom_call.1} parent=19 // pred_region
          %s195 = sand.u32 %s75, 1
          %s196 = scalar_lea.sflag [#allocation7], %s195
          %s197 = sand.u32 %s75, 1
          %s198 = smul.addr %s197, 256
          %s199 = scalar_lea.vmem [#allocation6], %s198
          %s200 = smul.u32 16, %s24
          %s201 = smul.u32 4, %s25
          %203 = vsyncadd %s196, 0
          %s204 = smul.addr %s200, 8
          %s205 = sadd.s32 %s201, %s204
          %s206 = smul.addr %s205, 4
          %s207 = scalar_lea.hbm %s1, %s206
          %s208 = sshll.u32 %s207, 4
          %s209 = int_to_ptr.hbm [resolvable:$true] %s208
          %s210 = sshll.u32 %s199, 4
          %s211 = int_to_ptr.vmem [resolvable:$true] %s210
          %216 = dma.hbm_to_vmem [thread:$0]  %s209, 4096, %s211, %s196, 512, 256, 16
        $region28: #{tpu_custom_call.1} parent=19 // pred_fallthru
          _
      $region20: #{tpu_custom_call.1} parent=5 // pred_fallthru
        _
      %p217 = scmp.le.s32.totalorder 1, %s16
      %p218 = scmp.lt.s32.totalorder %s16, 3
      %p219 = pnand %p217, %p218
      %p220 = pneg %p219
      // Predicated region
      $region29: #{tpu_custom_call.1} parent=5 // pred_check
        _
      $region30: #{tpu_custom_call.1} parent=5 // pred_check_branch
        %222 = sbr.rel (%p219) target = $region32
      $region31: #{tpu_custom_call.1} parent=5 // pred_region
        %s223 = ssub.s32 %s16, 1
        %s224 = sand.u32 %s50, 1
        %s225 = scalar_lea.sflag [#allocation4], %s224
        %s226 = sand.u32 %s50, 1
        %s227 = smul.addr %s226, 16
        %s228 = scalar_lea.vmem [#allocation3], %s227
        // Predicated region
        $region33: #{tpu_custom_call.1} parent=31 // pred_check
          %p229 = pneg %p63
        $region34: #{tpu_custom_call.1} parent=31 // pred_check_branch
          %231 = sbr.rel (%p229) target = $region36
        $region35: #{tpu_custom_call.1} parent=31 // pred_region
          %233 = dma.done %s225, 256
        $region36: #{tpu_custom_call.1} parent=31 // pred_fallthru
          _
        %s234 = sand.u32 %s78, 1
        %s235 = scalar_lea.sflag [#allocation7], %s234
        %s236 = sand.u32 %s78, 1
        %s237 = smul.addr %s236, 256
        %s238 = scalar_lea.vmem [#allocation6], %s237
        // Predicated region
        $region37: #{tpu_custom_call.1} parent=31 // pred_check
          %p239 = pneg %p91
        $region38: #{tpu_custom_call.1} parent=31 // pred_check_branch
          %241 = sbr.rel (%p239) target = $region40
        $region39: #{tpu_custom_call.1} parent=31 // pred_region
          %243 = dma.done %s235, 4096
        $region40: #{tpu_custom_call.1} parent=31 // pred_fallthru
          _
        %s244 = sand.u32 %s50, 1
        %s245 = scalar_lea.sflag [#allocation4], %s244
        %s246 = sand.u32 %s50, 1
        %s247 = smul.addr %s246, 16
        %s248 = scalar_lea.vmem [#allocation3], %s247
        %p249 = pneg %p63
        %p250 = pneg %p60
        %s251 = sand.u32 %s78, 1
        %s252 = scalar_lea.sflag [#allocation7], %s251
        %s253 = sand.u32 %s78, 1
        %s254 = smul.addr %s253, 256
        %s255 = scalar_lea.vmem [#allocation6], %s254
        %p256 = pneg %p91
        %p257 = pneg %p88
        %p258 = scmp.lt.s32.totalorder %s27, 0
        %s259 = scalar_select %p258, %s27, 0
        %s260 = scalar_lea.vmem %s2, %s259
        %p261 = pneg %p117
        %p262 = pneg %p114
        %p263 = pneg %p145
        %p264 = pneg %p142
        %s265 = smul.u32 4, %s28
        %s266 = smul.u32 16, %s27
        %s267 = smul.u32 4, %s28
        %p268 = scmp.lt.s32.totalorder %s27, 0
        %s269 = scalar_select %p268, %s27, 0
        %s270 = scalar_lea.vmem %s2, %s269
        %p271 = scmp.eq.s32.totalorder %s28, 0
        // Predicated region
        $region41: #{tpu_custom_call.1} parent=31 // pred_check
          %p272 = pneg %p271
        $region42: #{tpu_custom_call.1} parent=31 // pred_check_branch
          %274 = sbr.rel (%p272) target = $region44
        $region43: #{tpu_custom_call.1} parent=31 // pred_region
          %275 = vst [vmem:[#allocation2] sm:$0xff] 0.0
        $region44: #{tpu_custom_call.1} parent=31 // pred_fallthru
          _
        %v276 = vld [vmem:[#allocation2] sm:$0xff]
        %v277 = vld [vmem:[%s228] sm:$0xff]
        %v278 = vld [vmem:[%s228 + $0x8] sm:$0xff]
        %v279 = vld [vmem:[%s238] sm:$0xff]
        %v280 = vld [vmem:[%s238 + $0x8] sm:$0xff]
        %v281 = vld [vmem:[%s238 + $0x10] sm:$0xff]
        %v282 = vld [vmem:[%s238 + $0x18] sm:$0xff]
        %v283 = vld [vmem:[%s238 + $0x20] sm:$0xff]
        %v284 = vld [vmem:[%s238 + $0x28] sm:$0xff]
        %v285 = vld [vmem:[%s238 + $0x30] sm:$0xff]
        %v286 = vld [vmem:[%s238 + $0x38] sm:$0xff]
        %v287 = vld [vmem:[%s238 + $0x40] sm:$0xff]
        %v288 = vld [vmem:[%s238 + $0x48] sm:$0xff]
        %v289 = vld [vmem:[%s238 + $0x50] sm:$0xff]
        %v290 = vld [vmem:[%s238 + $0x58] sm:$0xff]
        %v291 = vld [vmem:[%s238 + $0x60] sm:$0xff]
        %v292 = vld [vmem:[%s238 + $0x68] sm:$0xff]
        %v293 = vld [vmem:[%s238 + $0x70] sm:$0xff]
        %v294 = vld [vmem:[%s238 + $0x78] sm:$0xff]
        %v295 = vld [vmem:[%s238 + $0x80] sm:$0xff]
        %v296 = vld [vmem:[%s238 + $0x88] sm:$0xff]
        %v297 = vld [vmem:[%s238 + $0x90] sm:$0xff]
        %v298 = vld [vmem:[%s238 + $0x98] sm:$0xff]
        %v299 = vld [vmem:[%s238 + $0xa0] sm:$0xff]
        %v300 = vld [vmem:[%s238 + $0xa8] sm:$0xff]
        %v301 = vld [vmem:[%s238 + $0xb0] sm:$0xff]
        %v302 = vld [vmem:[%s238 + $0xb8] sm:$0xff]
        %v303 = vld [vmem:[%s238 + $0xc0] sm:$0xff]
        %v304 = vld [vmem:[%s238 + $0xc8] sm:$0xff]
        %v305 = vld [vmem:[%s238 + $0xd0] sm:$0xff]
        %v306 = vld [vmem:[%s238 + $0xd8] sm:$0xff]
        %v307 = vld [vmem:[%s238 + $0xe0] sm:$0xff]
        %v308 = vld [vmem:[%s238 + $0xe8] sm:$0xff]
        %v309 = vld [vmem:[%s238 + $0xf0] sm:$0xff]
        %v310 = vld [vmem:[%s238 + $0xf8] sm:$0xff]
        %v313 = vunpack.c.l.b16 %v277
        %v314 = vunpack.c.h.b16 %v277
        %v315 = vunpack.c.l.b16 %v278
        %v316 = vunpack.c.h.b16 %v278
        %v317 = vpack.c.b16 %v313, %v313
        %v318 = vpack.c.b16 %v314, %v314
        %v319 = vpack.c.b16 %v315, %v315
        %v320 = vpack.c.b16 %v316, %v316
        %v357 = vunpack.c.l.b16 %v279
        %v358 = vunpack.c.h.b16 %v279
        %v359 = vunpack.c.l.b16 %v280
        %v360 = vunpack.c.h.b16 %v280
        %v361 = vunpack.c.l.b16 %v281
        %v362 = vunpack.c.h.b16 %v281
        %v363 = vunpack.c.l.b16 %v282
        %v364 = vunpack.c.h.b16 %v282
        %v365 = vunpack.c.l.b16 %v283
        %v366 = vunpack.c.h.b16 %v283
        %v367 = vunpack.c.l.b16 %v284
        %v368 = vunpack.c.h.b16 %v284
        %v369 = vunpack.c.l.b16 %v285
        %v370 = vunpack.c.h.b16 %v285
        %v371 = vunpack.c.l.b16 %v286
        %v372 = vunpack.c.h.b16 %v286
        %v373 = vunpack.c.l.b16 %v287
        %v374 = vunpack.c.h.b16 %v287
        %v375 = vunpack.c.l.b16 %v288
        %v376 = vunpack.c.h.b16 %v288
        %v377 = vunpack.c.l.b16 %v289
        %v378 = vunpack.c.h.b16 %v289
        %v379 = vunpack.c.l.b16 %v290
        %v380 = vunpack.c.h.b16 %v290
        %v381 = vunpack.c.l.b16 %v291
        %v382 = vunpack.c.h.b16 %v291
        %v383 = vunpack.c.l.b16 %v292
        %v384 = vunpack.c.h.b16 %v292
        %v385 = vunpack.c.l.b16 %v293
        %v386 = vunpack.c.h.b16 %v293
        %v387 = vunpack.c.l.b16 %v294
        %v388 = vunpack.c.h.b16 %v294
        %v389 = vunpack.c.l.b16 %v295
        %v390 = vunpack.c.h.b16 %v295
        %v391 = vunpack.c.l.b16 %v296
        %v392 = vunpack.c.h.b16 %v296
        %v393 = vunpack.c.l.b16 %v297
        %v394 = vunpack.c.h.b16 %v297
        %v395 = vunpack.c.l.b16 %v298
        %v396 = vunpack.c.h.b16 %v298
        %v397 = vunpack.c.l.b16 %v299
        %v398 = vunpack.c.h.b16 %v299
        %v399 = vunpack.c.l.b16 %v300
        %v400 = vunpack.c.h.b16 %v300
        %v401 = vunpack.c.l.b16 %v301
        %v402 = vunpack.c.h.b16 %v301
        %v403 = vunpack.c.l.b16 %v302
        %v404 = vunpack.c.h.b16 %v302
        %v405 = vunpack.c.l.b16 %v303
        %v406 = vunpack.c.h.b16 %v303
        %v407 = vunpack.c.l.b16 %v304
        %v408 = vunpack.c.h.b16 %v304
        %v409 = vunpack.c.l.b16 %v305
        %v410 = vunpack.c.h.b16 %v305
        %v411 = vunpack.c.l.b16 %v306
        %v412 = vunpack.c.h.b16 %v306
        %v413 = vunpack.c.l.b16 %v307
        %v414 = vunpack.c.h.b16 %v307
        %v415 = vunpack.c.l.b16 %v308
        %v416 = vunpack.c.h.b16 %v308
        %v417 = vunpack.c.l.b16 %v309
        %v418 = vunpack.c.h.b16 %v309
        %v419 = vunpack.c.l.b16 %v310
        %v420 = vunpack.c.h.b16 %v310
        %v421 = vpack.c.b16 %v361, %v357
        %v422 = vpack.c.b16 %v362, %v358
        %v423 = vpack.c.b16 %v363, %v359
        %v424 = vpack.c.b16 %v364, %v360
        %v425 = vpack.c.b16 %v369, %v365
        %v426 = vpack.c.b16 %v370, %v366
        %v427 = vpack.c.b16 %v371, %v367
        %v428 = vpack.c.b16 %v372, %v368
        %v429 = vpack.c.b16 %v377, %v373
        %v430 = vpack.c.b16 %v378, %v374
        %v431 = vpack.c.b16 %v379, %v375
        %v432 = vpack.c.b16 %v380, %v376
        %v433 = vpack.c.b16 %v385, %v381
        %v434 = vpack.c.b16 %v386, %v382
        %v435 = vpack.c.b16 %v387, %v383
        %v436 = vpack.c.b16 %v388, %v384
        %v437 = vpack.c.b16 %v393, %v389
        %v438 = vpack.c.b16 %v394, %v390
        %v439 = vpack.c.b16 %v395, %v391
        %v440 = vpack.c.b16 %v396, %v392
        %v441 = vpack.c.b16 %v401, %v397
        %v442 = vpack.c.b16 %v402, %v398
        %v443 = vpack.c.b16 %v403, %v399
        %v444 = vpack.c.b16 %v404, %v400
        %v445 = vpack.c.b16 %v409, %v405
        %v446 = vpack.c.b16 %v410, %v406
        %v447 = vpack.c.b16 %v411, %v407
        %v448 = vpack.c.b16 %v412, %v408
        %v449 = vpack.c.b16 %v417, %v413
        %v450 = vpack.c.b16 %v418, %v414
        %v451 = vpack.c.b16 %v419, %v415
        %v452 = vpack.c.b16 %v420, %v416
        %485 = vmatpush.bf16.xpose.msra.mxu0 %v449
        %486 = vmatpush.bf16.xpose.msra.mxu0 %v445
        %487 = vmatpush.bf16.xpose.msra.mxu0 %v441
        %488 = vmatpush.bf16.xpose.msra.mxu0 %v437
        %489 = vmatpush.bf16.xpose.msra.mxu0 %v433
        %490 = vmatpush.bf16.xpose.msra.mxu0 %v429
        %491 = vmatpush.bf16.xpose.msra.mxu0 %v425
        %492 = vmatpush.bf16.xpose.msra.mxu0 %v421
        %493 = vmatmul.bf16.gmra.mxu0 %v317
        %v494 = vpop.f32.mrf.mxu0
        %v495 = vadd.f32 0.0, %v494
        %v496 = vpop.f32.mrf.mxu0
        %497 = vdwg.mxu0
        %498 = vmatpush.bf16.xpose.msra.mxu0 %v450
        %499 = vmatpush.bf16.xpose.msra.mxu0 %v446
        %500 = vmatpush.bf16.xpose.msra.mxu0 %v442
        %501 = vmatpush.bf16.xpose.msra.mxu0 %v438
        %502 = vmatpush.bf16.xpose.msra.mxu0 %v434
        %503 = vmatpush.bf16.xpose.msra.mxu0 %v430
        %504 = vmatpush.bf16.xpose.msra.mxu0 %v426
        %505 = vmatpush.bf16.xpose.msra.mxu0 %v422
        %506 = vmatmul.bf16.gmra.mxu0 %v318
        %v507 = vpop.f32.mrf.mxu0
        %v508 = vadd.f32 %v495, %v507
        %v509 = vpop.f32.mrf.mxu0
        %510 = vdwg.mxu0
        %511 = vmatpush.bf16.xpose.msra.mxu0 %v451
        %512 = vmatpush.bf16.xpose.msra.mxu0 %v447
        %513 = vmatpush.bf16.xpose.msra.mxu0 %v443
        %514 = vmatpush.bf16.xpose.msra.mxu0 %v439
        %515 = vmatpush.bf16.xpose.msra.mxu0 %v435
        %516 = vmatpush.bf16.xpose.msra.mxu0 %v431
        %517 = vmatpush.bf16.xpose.msra.mxu0 %v427
        %518 = vmatpush.bf16.xpose.msra.mxu0 %v423
        %519 = vmatmul.bf16.gmra.mxu0 %v319
        %v520 = vpop.f32.mrf.mxu0
        %v521 = vadd.f32 %v508, %v520
        %v522 = vpop.f32.mrf.mxu0
        %523 = vdwg.mxu0
        %524 = vmatpush.bf16.xpose.msra.mxu0 %v452
        %525 = vmatpush.bf16.xpose.msra.mxu0 %v448
        %526 = vmatpush.bf16.xpose.msra.mxu0 %v444
        %527 = vmatpush.bf16.xpose.msra.mxu0 %v440
        %528 = vmatpush.bf16.xpose.msra.mxu0 %v436
        %529 = vmatpush.bf16.xpose.msra.mxu0 %v432
        %530 = vmatpush.bf16.xpose.msra.mxu0 %v428
        %531 = vmatpush.bf16.xpose.msra.mxu0 %v424
        %532 = vmatmul.bf16.gmra.mxu0 %v320
        %v533 = vpop.f32.mrf.mxu0
        %v534 = vadd.f32 %v521, %v533
        %v535 = vpop.f32.mrf.mxu0
        %536 = vdwg.mxu0
        %v537 = vadd.f32 %v276, %v534
        %538 = vst [vmem:[#allocation2] sm:$0xff] %v537
        %p539 = scmp.eq.s32.totalorder %s28, 1
        // Predicated region
        $region45: #{tpu_custom_call.1} parent=31 // pred_check
          %p540 = pneg %p539
        $region46: #{tpu_custom_call.1} parent=31 // pred_check_branch
          %542 = sbr.rel (%p540) target = $region48
        $region47: #{tpu_custom_call.1} parent=31 // pred_region
          %v543 = vld [vmem:[#allocation2] sm:$0xff]
          %v544 = vld [vmem:[%s270] sm:$0x1]
          %v546 = vperm.slane %v544, 0
          %v548 = vadd.f32 %v543, %v546
          %549 = vst [vmem:[#allocation8] sm:$0xff] %v548
        $region48: #{tpu_custom_call.1} parent=31 // pred_fallthru
          _
        // Predicated region
        $region49: #{tpu_custom_call.1} parent=31 // pred_check
          %p550 = pneg %p142
        $region50: #{tpu_custom_call.1} parent=31 // pred_check_branch
          %552 = sbr.rel (%p550) target = $region52
        $region51: #{tpu_custom_call.1} parent=31 // pred_region
          %554 = vsyncadd [#allocation5], 0
          %s555 = sadd.s32 %s27, %s26
          %s556 = smul.addr %s555, 8
          %s557 = scalar_lea.hbm %s3, %s556
          %s559 = sshll.u32 [#allocation8], 4
          %s560 = int_to_ptr.vmem [resolvable:$true] %s559
          %s561 = sshll.u32 %s557, 4
          %s562 = int_to_ptr.hbm [resolvable:$true] %s561
          %564 = dma.vmem_to_hbm [thread:$0]  %s560, 128, %s562, [#allocation5]
        $region52: #{tpu_custom_call.1} parent=31 // pred_fallthru
          _
        // Predicated region
        $region53: #{tpu_custom_call.1} parent=31 // pred_check
          %p565 = pneg %p142
        $region54: #{tpu_custom_call.1} parent=31 // pred_check_branch
          %567 = sbr.rel (%p565) target = $region56
        $region55: #{tpu_custom_call.1} parent=31 // pred_region
          %569 = dma.done [#allocation5], 128
        $region56: #{tpu_custom_call.1} parent=31 // pred_fallthru
          _
      $region32: #{tpu_custom_call.1} parent=5 // pred_fallthru
        _
      %p570 = scmp.le.s32.totalorder 2, %s16
      // Predicated region
      $region57: #{tpu_custom_call.1} parent=5 // pred_check
        %p571 = pneg %p570
      $region58: #{tpu_custom_call.1} parent=5 // pred_check_branch
        %573 = sbr.rel (%p571) target = $region60
      $region59: #{tpu_custom_call.1} parent=5 // pred_region
        %s574 = ssub.s32 %s16, 2
      $region60: #{tpu_custom_call.1} parent=5 // pred_fallthru
        _
    $region6: #{tpu_custom_call.1} parent=1 // loop_footer
      %s20 = sadd.s32 1, %s16
    $region7: #{tpu_custom_call.1} parent=1 // loop_footer_branch
      %15 = sbr.rel target = $region3
    $region8: #{tpu_custom_call.1} parent=1 // loop_exit
      _
    %575 = vsyncpa [#allocation4], 1
    %s576 = scalar_lea.sflag [#allocation4], 1
    %577 = vsyncpa %s576, 1
    %578 = vsyncpa [#allocation7], 1
    %s579 = scalar_lea.sflag [#allocation7], 1
    %580 = vsyncpa %s579, 1
    %581 = vsyncpa [#allocation5], 1
    %s582 = scalar_lea.sflag [#allocation5], 1
    %583 = vsyncpa %s582, 1

</llo_original>
